<compile_context>
chip_gen: v7x
topology: tpu7x:2x2x1
jax: 0.10.0
libtpu: 0.0.40
codegen_flags: <defaults>
</compile_context>

<pallas_src>
import jax
import jax.numpy as jnp
from jax.experimental import pallas as pl
from jax.experimental.pallas import tpu as pltpu

WIDTH = 1024  # lane-dense last dim (multiple of 128)


def _round_up(x, m):
    return ((x + m - 1) // m) * m


def _min_sublanes(dtype):
    # f32 -> 8, bf16 -> 16, int8/fp8 -> 32 (fully-packed vreg sublane count).
    itemsize = jnp.dtype(dtype).itemsize
    return 8 * max(1, 4 // max(1, itemsize))


def _hw_params():
    """Best-effort generation-aware sizing; falls back to safe defaults."""
    phys_vmem = 128 * 1024 * 1024              # v5e/v6e physical VMEM per TC
    try:
        phys_vmem = int(pltpu.get_tpu_info().vmem_capacity_bytes)
    except Exception:
        pass
    # v7x is the only generation with 64 MiB VMEM per TensorCore; use that as
    # the generation signal (it also has ~2.3x v6e's HBM bandwidth).
    is_v7x = phys_vmem <= 64 * 1024 * 1024
    vmem_limit = min(phys_vmem // 2, 64 * 1024 * 1024)
    # Combined (input + output) bytes per grid step.  The pipeline
    # double-buffers both, so 2 * target must stay under vmem_limit with
    # headroom for Mosaic's internal scratch.
    target_io_block_bytes = min(16 * 1024 * 1024, (vmem_limit // 8) * 3)
    # Below this many input bytes XLA's fused elementwise op beats the
    # pallas_call launch + pipeline prologue; faster HBM raises the crossover.
    min_pallas_bytes = (4 if is_v7x else 2) * 1024 * 1024
    return vmem_limit, target_io_block_bytes, min_pallas_bytes


def _make_elementwise_kernel(lambd):
    def kernel(x_ref, o_ref):
        o_ref[...] = lambd(x_ref[...]).astype(o_ref.dtype)
    return kernel


def _run_rows_kernel(x2d, lambd, out_dtype, *, sub, vmem_limit, target_io_bytes):
    """Apply `lambd` over a lane-dense (rows, WIDTH) slab with a Pallas grid."""
    rows = x2d.shape[0]
    in_item = jnp.dtype(x2d.dtype).itemsize
    out_item = jnp.dtype(out_dtype).itemsize
    io_item = in_item + out_item

    # ~6-8 MiB input blocks, sized for in+out together so dtype-promoting
    # lambdas do not blow the double-buffered VMEM budget.
    block_rows = max(sub, (target_io_bytes // (WIDTH * io_item)) // sub * sub)

    # Keep >= 4 grid steps when the input is big enough: >= 2 steps per
    # TensorCore on v7x (megacore split) and enough depth for the
    # double-buffered pipeline to overlap in-DMA / compute / out-DMA.
    MIN_GRID_STEPS = 4
    if rows >= MIN_GRID_STEPS * sub:
        block_rows = min(block_rows,
                         max(sub, _round_up(pl.cdiv(rows, MIN_GRID_STEPS), sub)))

    # Legality: block_rows must be a multiple of the sublane tile *or* equal
    # the full rows extent; small inputs get one full-extent block.
    if block_rows >= rows:
        block_rows = rows

    grid = (pl.cdiv(rows, block_rows),)   # ragged last block is masked by Pallas

    return pl.pallas_call(
        _make_elementwise_kernel(lambd),
        out_shape=jax.ShapeDtypeStruct((rows, WIDTH), out_dtype),
        grid_spec=pltpu.PrefetchScalarGridSpec(
            num_scalar_prefetch=0,
            grid=grid,
            # TODO(synk): optionally sweep pipeline_mode=pl.Buffered(3) here;
            # a pure-DMA pipeline sometimes gains a few % from a third buffer.
            in_specs=[pl.BlockSpec((block_rows, WIDTH), lambda i: (i, 0))],
            out_specs=pl.BlockSpec((block_rows, WIDTH), lambda i: (i, 0)),
        ),
        compiler_params=pltpu.CompilerParams(
            dimension_semantics=("parallel",),
            vmem_limit_bytes=vmem_limit),
    )(x2d)


def _lambda_pallas(x, lambd):
    """Apply an elementwise, shape-preserving `lambd` via a Pallas kernel."""
    in_shape = x.shape
    in_dtype = x.dtype
    n = x.size

    # Resolve the lambda's output shape/dtype without running it, so dtype
    # changes (e.g. bf16 -> f32 promotion) are preserved, not cast away.
    try:
        out_aval = jax.eval_shape(lambd, jax.ShapeDtypeStruct(in_shape, in_dtype))
    except Exception:
        return lambd(x)          # not traceable on abstract values: plain JAX
    if out_aval.shape != in_shape:
        # TODO(synk): shape-changing lambdas (slicing/padding shortcuts) need
        # a bespoke BlockSpec design; fall back to plain JAX for correctness.
        return lambd(x)
    out_dtype = out_aval.dtype

    vmem_limit, target_io_bytes, _ = _hw_params()
    sub = _min_sublanes(in_dtype)

    flat = x.reshape(-1)                 # contiguous reshape: no HBM copy
    aligned = (n // WIDTH) * WIDTH
    rows = aligned // WIDTH

    if rows == 0:
        return lambd(x)                  # less than one lane row: plain JAX

    if aligned == n:
        # Common case: zero-copy lane-dense relayout, no padding, no slicing.
        out2d = _run_rows_kernel(flat.reshape(rows, WIDTH), lambd, out_dtype,
                                 sub=sub, vmem_limit=vmem_limit,
                                 target_io_bytes=target_io_bytes)
        return out2d.reshape(in_shape)

    # Ragged size: run the kernel on the aligned prefix (no full-array
    # pad / slice passes) and handle the < WIDTH-element tail in plain JAX.
    prefix = flat[:aligned].reshape(rows, WIDTH)
    out2d = _run_rows_kernel(prefix, lambd, out_dtype,
                             sub=sub, vmem_limit=vmem_limit,
                             target_io_bytes=target_io_bytes)
    tail_out = lambd(flat[aligned:]).astype(out_dtype)
    return jnp.concatenate([out2d.reshape(-1), tail_out]).reshape(in_shape)


class LambdaLayer:
    """JAX/Pallas port of the PyTorch LambdaLayer (forward = self.lambd(x)).

    `lambd` must be jnp-traceable.  Elementwise, shape-preserving lambdas run
    inside a Pallas TPU kernel for inputs above `min_pallas_bytes` (auto,
    generation-aware); everything else falls back to plain JAX with identical
    semantics.
    """

    def __init__(self, lambd, min_pallas_bytes=None):
        self.lambd = lambd
        if min_pallas_bytes is None:
            _, _, min_pallas_bytes = _hw_params()
        self.min_pallas_bytes = min_pallas_bytes

    def __call__(self, x):
        if x.size * jnp.dtype(x.dtype).itemsize < self.min_pallas_bytes:
            # Launch + pipeline prologue dominate at this size; XLA's fused
            # elementwise op is strictly faster.
            return self.lambd(x)
        return _lambda_pallas(x, self.lambd)


if __name__ == "__main__":
    key = jax.random.PRNGKey(0)
    lambd = lambda t: t * 2.0 + 1.0

    # Force the Pallas path (min_pallas_bytes=0) so the kernel itself runs on
    # the small demo shapes; the default-threshold layer exercises the
    # plain-JAX fast path.
    pallas_layer = LambdaLayer(lambd, min_pallas_bytes=0)
    default_layer = LambdaLayer(lambd)

    # 1) NCHW input matching the PyTorch convention (WIDTH-aligned, zero-copy).
    x = jax.random.normal(key, (2, 4, 16, 16), dtype=jnp.float32)
    out = jax.block_until_ready(pallas_layer(x))
    ref = lambd(x)
    assert out.shape == x.shape and out.dtype == ref.dtype
    assert jnp.allclose(out, ref, atol=1e-6, rtol=1e-6)

    # 2) Ragged size -> aligned-prefix kernel + plain-JAX tail (no pad/slice).
    y = jax.random.normal(jax.random.PRNGKey(1), (2, 3, 37, 53), dtype=jnp.float32)
    out_y = jax.block_until_ready(pallas_layer(y))
    ref_y = lambd(y)
    assert out_y.shape == y.shape
    assert jnp.allclose(out_y, ref_y, atol=1e-6, rtol=1e-6)

    # 3) bf16 input -> dtype-derived sublane tiling, dtype preserved.
    z = jax.random.normal(key, (2, 4, 16, 16), dtype=jnp.bfloat16)
    out_z = jax.block_until_ready(pallas_layer(z))
    ref_z = lambd(z)
    assert out_z.shape == z.shape and out_z.dtype == ref_z.dtype
    assert jnp.allclose(out_z.astype(jnp.float32), ref_z.astype(jnp.float32),
                        atol=1e-2, rtol=1e-2)

    # 4) Multi-step grid with a masked partial last block
    #    (rows = 216 -> block_rows = 56 -> 4 steps, last block ragged).
    w = jax.random.normal(jax.random.PRNGKey(2), (3, 72, 1024), dtype=jnp.float32)
    out_w = jax.block_until_ready(pallas_layer(w))
    ref_w = lambd(w)
    assert out_w.shape == w.shape
    assert jnp.allclose(out_w, ref_w, atol=1e-6, rtol=1e-6)

    # 5) Small-input fast path (plain JAX) matches too.
    out_fast = jax.block_until_ready(default_layer(x))
    assert jnp.allclose(out_fast, ref, atol=1e-6, rtol=1e-6)

    print("KERNEL_OK")
</pallas_src>

<mosaic_0001>
module attributes {stable_mosaic.version = 11 : i64} {
  func.func @kernel(%arg0: i32, %arg1: memref<2x1024xf32, #tpu.memory_space<vmem>>, %arg2: memref<2x1024xf32, #tpu.memory_space<vmem>>) attributes {dimension_semantics = [#tpu.dimension_semantics<parallel>], iteration_bounds = array<i64: 1>, scalar_prefetch = 0 : i64, scratch_operands = 0 : i64, tpu.core_type = #tpu.core_type<tc>, window_params = [{transform_indices = @transform_0, window_bounds = array<i64: 2, 1024>}, {transform_indices = @transform_1, window_bounds = array<i64: 2, 1024>}]} {
    %c0 = arith.constant 0 : index
    %c0_0 = arith.constant 0 : index
    %0 = vector.load %arg1[%c0, %c0_0] : memref<2x1024xf32, #tpu.memory_space<vmem>>, vector<2x1024xf32>
    %cst = arith.constant 2.000000e+00 : f32
    %1 = vector.broadcast %cst : f32 to vector<2x1024xf32>
    %2 = arith.mulf %0, %1 : vector<2x1024xf32>
    %cst_1 = arith.constant 1.000000e+00 : f32
    %3 = vector.broadcast %cst_1 : f32 to vector<2x1024xf32>
    %4 = arith.addf %2, %3 : vector<2x1024xf32>
    %c0_2 = arith.constant 0 : index
    %c0_3 = arith.constant 0 : index
    %5 = vector.load %arg2[%c0_2, %c0_3] : memref<2x1024xf32, #tpu.memory_space<vmem>>, vector<2x1024xf32>
    tpu.vector_store %arg2[%c0_2, %c0_3], %4 {strides = array<i32>} : memref<2x1024xf32, #tpu.memory_space<vmem>>, vector<2x1024xf32>,
    return
  }
  func.func @transform_0(%arg0: i32) -> (i32, i32) {
    %c0_i32 = arith.constant 0 : i32
    %c0_i32_0 = arith.constant 0 : i32
    return %arg0, %c0_i32 : i32, i32
  }
  func.func @transform_1(%arg0: i32) -> (i32, i32) {
    %c0_i32 = arith.constant 0 : i32
    %c0_i32_0 = arith.constant 0 : i32
    return %arg0, %c0_i32 : i32, i32
  }
}

</mosaic_0001>

<llo_original>
// kernel: tpu_custom_call.1
$region0: #{tpu_custom_call.1}
  #allocation0 [shape = 'u32[]', space=smem, size = 0x4, offset = 0x4, fixed_abs, tag = 'smem constant byte address 0x4 - core index']
  #allocation1 [shape = 'u32[144,128]{1,0:T(1,128)}', space=vmem, size = 0x12000, scoped, tag = 'internal scratch']
  %s0 = inlined_call_operand.hbm [shape: f32[2,1024], index: 0, kind: input, shape index: {}]
  %s1 = inlined_call_operand.hbm [shape: f32[2,1024], index: 1, kind: output, shape index: {}]
  %s2 = sld [smem:[#allocation0]]
  $region18: #{tpu_custom_call.1} parent=0
    _
  %s4 = ssub.s32 1, %s2
  %s5 = scalar_select 0, %s4, %s2
  $region1: #{tpu_custom_call.1} parent=0
    #allocation2 [shape = 'u8[8192]{0}', space=vmem, size = 0x2000, scoped, tag = 'input window, operand 0, single buffered']
    #allocation3 [shape = 's32[1]{0}', space=sflag, size = 0x4, scoped, tag = 'scoped memory for tpu_custom_call.1']
    #allocation4 [shape = 's32[1]{0}', space=sflag, size = 0x4, scoped, tag = 'scoped memory for tpu_custom_call.1']
    #allocation5 [shape = 'u8[8192]{0}', space=vmem, size = 0x2000, scoped, tag = 'output window, operand 0, single buffered']
    %6 = vsyncpa [#allocation3], 0
    %7 = vsyncpa [#allocation4], 0
    // Predicated region
    $region2: #{tpu_custom_call.1} parent=1 // pred_check
      _
    $region3: #{tpu_custom_call.1} parent=1 // pred_check_branch
      %9 = sbr.rel (0) target = $region5
    $region4: #{tpu_custom_call.1} parent=1 // pred_region
      %s11 = ssub.s32 256, 256
      %12 = vsyncadd [#allocation3], %s11
      %s14 = sshll.u32 [#allocation2], 4
      %s15 = int_to_ptr.vmem [resolvable:$true] %s14
      %17 = dma.hbm_to_vmem [thread:$0]  %s0, 256, %s15, [#allocation3]
    $region5: #{tpu_custom_call.1} parent=1 // pred_fallthru
      _
    // Predicated region
    $region6: #{tpu_custom_call.1} parent=1 // pred_check
      _
    $region7: #{tpu_custom_call.1} parent=1 // pred_check_branch
      %19 = sbr.rel (0) target = $region9
    $region8: #{tpu_custom_call.1} parent=1 // pred_region
      %20 = dma.done [#allocation3], 256
    $region9: #{tpu_custom_call.1} parent=1 // pred_fallthru
      _
    %v21 = vld [vmem:[#allocation2] sm:$0xff]
    %v22 = vld [vmem:[#allocation2 + $0x8] sm:$0xff]
    %v23 = vmul.f32 %v21, 2.0
    %v24 = vmul.f32 %v22, 2.0
    %v25 = vadd.f32 %v23, 1.0
    %v26 = vadd.f32 %v24, 1.0
    %27 = vst [vmem:[#allocation5] sm:$0xff] %v25
    %28 = vst [vmem:[#allocation5 + $0x8] sm:$0xff] %v26
    // Predicated region
    $region10: #{tpu_custom_call.1} parent=1 // pred_check
      _
    $region11: #{tpu_custom_call.1} parent=1 // pred_check_branch
      %30 = sbr.rel (0) target = $region13
    $region12: #{tpu_custom_call.1} parent=1 // pred_region
      %s32 = ssub.s32 256, 256
      %33 = vsyncadd [#allocation4], %s32
      %s35 = sshll.u32 [#allocation5], 4
      %s36 = int_to_ptr.vmem [resolvable:$true] %s35
      %38 = dma.vmem_to_hbm [thread:$0]  %s36, 256, %s1, [#allocation4]
    $region13: #{tpu_custom_call.1} parent=1 // pred_fallthru
      _
    // Predicated region
    $region14: #{tpu_custom_call.1} parent=1 // pred_check
      _
    $region15: #{tpu_custom_call.1} parent=1 // pred_check_branch
      %40 = sbr.rel (0) target = $region17
    $region16: #{tpu_custom_call.1} parent=1 // pred_region
      %41 = dma.done [#allocation4], 256
    $region17: #{tpu_custom_call.1} parent=1 // pred_fallthru
      _
    %42 = vsyncpa [#allocation3], 1
    %43 = vsyncpa [#allocation4], 1

</llo_original>
